<compile_context>
chip_gen: v7x
topology: tpu7x:2x2x1
jax: 0.10.0
libtpu: 0.0.40
codegen_flags: <defaults>
</compile_context>

<pallas_src>
import functools

import jax
import jax.numpy as jnp
from jax import lax
from jax.experimental import pallas as pl
from jax.experimental.pallas import tpu as pltpu


def _hash_uniform_u32(shape, row_base, seed_u32):
    """Stateless counter-based uint32 hash (murmur3-style finalizer).

    Portable replacement for the HW PRNG: pure VPU integer ops, works both
    compiled on TPU and in CPU interpret mode.
    """
    r = lax.broadcasted_iota(jnp.int32, shape, 0) + row_base
    c = lax.broadcasted_iota(jnp.int32, shape, 1)
    idx = (r * shape[1] + c).astype(jnp.uint32)          # global element index
    h = idx ^ (seed_u32 * jnp.uint32(0x9E3779B9))
    h = h * jnp.uint32(0xCC9E2D51)
    h = h ^ (h >> 15)
    h = h * jnp.uint32(0x1B873593)
    h = h ^ (h >> 13)
    h = h * jnp.uint32(0xC2B2AE35)
    h = h ^ (h >> 16)
    return h


def _sublayer_connection_kernel(seed_ref, x_ref, gamma_ref, beta_ref,
                                w_ref, b_ref, o_ref, *, eps, drop_p):
    x = x_ref[...].astype(jnp.float32)                   # (TM, D) row tile
    tm, d = x.shape

    # Hoisted parameter reads (read once per grid step, broadcast once).
    gamma = gamma_ref[...].astype(jnp.float32)           # (1, D)
    beta = beta_ref[...].astype(jnp.float32)             # (1, D)
    bias = b_ref[...].astype(jnp.float32)                # (1, D)

    # --- LayerNorm (bert_pytorch style: torch.std => ddof=1, eps on std) ---
    mean = jnp.mean(x, axis=-1, keepdims=True)
    diff = x - mean
    var = jnp.sum(diff * diff, axis=-1, keepdims=True) * (1.0 / (d - 1))
    std = jnp.sqrt(var)
    inv = pl.reciprocal(std + eps, approx=True)          # EUP, frees VALU slots
    normed = diff * inv * gamma + beta

    # --- sublayer: Linear(size, size) on the MXU (bf16 operands, f32 acc) ---
    y = jnp.dot(normed.astype(w_ref.dtype), w_ref[...],
                preferred_element_type=jnp.float32) + bias

    # --- dropout (training semantics, integer-domain keep test) ---
    if drop_p > 0.0:
        row_base = pl.program_id(0) * tm                 # per-tile distinct mask
        seed_u = seed_ref[0].astype(jnp.uint32)
        bits = _hash_uniform_u32((tm, d), row_base, seed_u)
        thresh = jnp.uint32(min(int(drop_p * 4294967296.0), 4294967295))
        keep = bits >= thresh                            # P(keep) = 1 - drop_p
        y = jnp.where(keep, y * (1.0 / (1.0 - drop_p)), 0.0)

    # --- residual add ---
    o_ref[...] = (x + y).astype(o_ref.dtype)


def sublayer_connection(x, gamma, beta, w, b, *, dropout=0.1, seed=0,
                        eps=1e-6, block_rows=512):
    """x: (batch, seq, hidden). Returns x + dropout(Linear(LayerNorm(x)))."""
    batch, seq, hidden = x.shape
    rows = batch * seq
    x2 = x.reshape(rows, hidden)
    gamma2 = gamma.reshape(1, hidden).astype(jnp.float32)
    beta2 = beta.reshape(1, hidden).astype(jnp.float32)
    b2 = b.reshape(1, hidden).astype(jnp.float32)
    w_mxu = w.astype(jnp.bfloat16)        # half the W DMA, full MXU throughput
    seed_arr = jnp.asarray([seed], dtype=jnp.int32)

    # Row tile: large enough to pipeline well, sublane-aligned, <= rows.
    tm = min(block_rows, rows)
    if tm != rows:
        tm = max(8, (tm // 8) * 8)
    grid = (pl.cdiv(rows, tm),)

    kernel = functools.partial(_sublayer_connection_kernel,
                               eps=float(eps), drop_p=float(dropout))

    cost = pl.CostEstimate(
        flops=2 * rows * hidden * hidden + 10 * rows * hidden,
        transcendentals=2 * rows,
        bytes_accessed=(2 * rows * hidden * x.dtype.itemsize
                        + hidden * hidden * w_mxu.dtype.itemsize),
    )

    out = pl.pallas_call(
        kernel,
        out_shape=jax.ShapeDtypeStruct((rows, hidden), x.dtype),
        grid_spec=pltpu.PrefetchScalarGridSpec(
            num_scalar_prefetch=1,
            grid=grid,
            in_specs=[
                pl.BlockSpec((tm, hidden), lambda i, s: (i, 0)),      # x tile
                pl.BlockSpec((1, hidden), lambda i, s: (0, 0)),       # gamma (resident)
                pl.BlockSpec((1, hidden), lambda i, s: (0, 0)),       # beta  (resident)
                pl.BlockSpec((hidden, hidden), lambda i, s: (0, 0)),  # W     (resident)
                pl.BlockSpec((1, hidden), lambda i, s: (0, 0)),       # bias  (resident)
            ],
            out_specs=pl.BlockSpec((tm, hidden), lambda i, s: (i, 0)),
        ),
        compiler_params=pltpu.CompilerParams(
            dimension_semantics=("parallel",),   # rows independent -> megacore on v7x
            vmem_limit_bytes=64 * 1024 * 1024,
        ),
        cost_estimate=cost,
    )(seed_arr, x2, gamma2, beta2, w_mxu, b2)
    return out.reshape(batch, seq, hidden)


def _reference_no_dropout(x, gamma, beta, w, b, eps=1e-6):
    """Plain-JAX reference of x + Linear(LayerNorm(x)) (dropout disabled)."""
    xf = x.astype(jnp.float32)
    mean = jnp.mean(xf, axis=-1, keepdims=True)
    diff = xf - mean
    var = jnp.sum(diff * diff, axis=-1, keepdims=True) / (x.shape[-1] - 1)
    std = jnp.sqrt(var)
    normed = gamma * diff / (std + eps) + beta
    y = normed @ w + b
    return (xf + y).astype(x.dtype)


if __name__ == "__main__":
    batch, seq, hidden = 2, 8, 32

    key = jax.random.PRNGKey(0)
    kx, kw = jax.random.split(key)
    x = jax.random.normal(kx, (batch, seq, hidden), dtype=jnp.float32)

    # Deterministic parameter init (module __init__ shapes):
    #   LayerNorm(size): a_2 = ones(size), b_2 = zeros(size)
    gamma = jnp.ones((hidden,), dtype=jnp.float32)
    beta = jnp.zeros((hidden,), dtype=jnp.float32)
    #   representative sublayer Linear(size, size)
    w = (jax.random.normal(kw, (hidden, hidden), dtype=jnp.float32)
         * (1.0 / jnp.sqrt(hidden)))
    b = jnp.zeros((hidden,), dtype=jnp.float32)

    # 1) Correctness check with dropout disabled (p=0 -> identity dropout).
    #    Tolerance loosened vs. all-f32 because the MXU operands are bf16.
    out_nodrop = jax.block_until_ready(
        sublayer_connection(x, gamma, beta, w, b, dropout=0.0, seed=0))
    ref = _reference_no_dropout(x, gamma, beta, w, b)
    assert out_nodrop.shape == (batch, seq, hidden)
    assert jnp.allclose(out_nodrop, ref, atol=2e-2, rtol=2e-2), "mismatch vs ref"

    # 2) Run with dropout enabled (training semantics, in-kernel hashed mask).
    out_drop = jax.block_until_ready(
        sublayer_connection(x, gamma, beta, w, b, dropout=0.1, seed=1234))
    assert out_drop.shape == (batch, seq, hidden)
    assert bool(jnp.all(jnp.isfinite(out_drop)))

    print("KERNEL_OK")
</pallas_src>

<mosaic_0001>
module attributes {stable_mosaic.version = 11 : i64} {
  func.func @_sublayer_connection_kernel(%arg0: i32, %arg1: memref<1xi32, #tpu.memory_space<smem>>, %arg2: memref<16x32xf32, #tpu.memory_space<vmem>>, %arg3: memref<1x32xf32, #tpu.memory_space<vmem>>, %arg4: memref<1x32xf32, #tpu.memory_space<vmem>>, %arg5: memref<32x32xbf16, #tpu.memory_space<vmem>>, %arg6: memref<1x32xf32, #tpu.memory_space<vmem>>, %arg7: memref<16x32xf32, #tpu.memory_space<vmem>>) attributes {dimension_semantics = [#tpu.dimension_semantics<parallel>], iteration_bounds = array<i64: 1>, scalar_prefetch = 1 : i64, scratch_operands = 0 : i64, tpu.core_type = #tpu.core_type<tc>, window_params = [{transform_indices = @transform_0, window_bounds = array<i64: 16, 32>}, {pipeline_mode = #tpu.pipeline_mode<synchronous>, transform_indices = @transform_1, window_bounds = array<i64: 1, 32>}, {pipeline_mode = #tpu.pipeline_mode<synchronous>, transform_indices = @transform_2, window_bounds = array<i64: 1, 32>}, {pipeline_mode = #tpu.pipeline_mode<synchronous>, transform_indices = @transform_3, window_bounds = array<i64: 32, 32>}, {pipeline_mode = #tpu.pipeline_mode<synchronous>, transform_indices = @transform_4, window_bounds = array<i64: 1, 32>}, {transform_indices = @transform_5, window_bounds = array<i64: 16, 32>}]} {
    %c0 = arith.constant 0 : index
    %c0_0 = arith.constant 0 : index
    %0 = vector.load %arg2[%c0, %c0_0] : memref<16x32xf32, #tpu.memory_space<vmem>>, vector<16x32xf32>
    %c0_1 = arith.constant 0 : index
    %c0_2 = arith.constant 0 : index
    %1 = vector.load %arg3[%c0_1, %c0_2] : memref<1x32xf32, #tpu.memory_space<vmem>>, vector<1x32xf32>
    %c0_3 = arith.constant 0 : index
    %c0_4 = arith.constant 0 : index
    %2 = vector.load %arg4[%c0_3, %c0_4] : memref<1x32xf32, #tpu.memory_space<vmem>>, vector<1x32xf32>
    %c0_5 = arith.constant 0 : index
    %c0_6 = arith.constant 0 : index
    %3 = vector.load %arg6[%c0_5, %c0_6] : memref<1x32xf32, #tpu.memory_space<vmem>>, vector<1x32xf32>
    %cst = arith.constant dense<0.000000e+00> : vector<16xf32>
    %4 = vector.multi_reduction <add>, %0, %cst [1] : vector<16x32xf32> to vector<16xf32>
    %5 = vector.shape_cast %4 : vector<16xf32> to vector<16x1xf32>
    %cst_7 = arith.constant 3.200000e+01 : f32
    %6 = vector.broadcast %cst_7 : f32 to vector<16x1xf32>
    %7 = arith.divf %5, %6 : vector<16x1xf32>
    %8 = vector.broadcast %7 : vector<16x1xf32> to vector<16x32xf32>
    %9 = arith.subf %0, %8 : vector<16x32xf32>
    %10 = arith.mulf %9, %9 : vector<16x32xf32>
    %cst_8 = arith.constant dense<0.000000e+00> : vector<16xf32>
    %11 = vector.multi_reduction <add>, %10, %cst_8 [1] : vector<16x32xf32> to vector<16xf32>
    %12 = vector.shape_cast %11 : vector<16xf32> to vector<16x1xf32>
    %cst_9 = arith.constant 0.0322580636 : f32
    %13 = vector.broadcast %cst_9 : f32 to vector<16x1xf32>
    %14 = arith.mulf %12, %13 : vector<16x1xf32>
    %15 = math.sqrt %14 : vector<16x1xf32>
    %cst_10 = arith.constant 9.99999997E-7 : f32
    %16 = vector.broadcast %cst_10 : f32 to vector<16x1xf32>
    %17 = arith.addf %15, %16 : vector<16x1xf32>
    %18 = tpu.reciprocal %17 {approx = true} : vector<16x1xf32> -> vector<16x1xf32>
    %19 = vector.broadcast %18 : vector<16x1xf32> to vector<16x32xf32>
    %20 = arith.mulf %9, %19 : vector<16x32xf32>
    %21 = vector.broadcast %1 : vector<1x32xf32> to vector<16x32xf32>
    %22 = arith.mulf %20, %21 : vector<16x32xf32>
    %23 = vector.broadcast %2 : vector<1x32xf32> to vector<16x32xf32>
    %24 = arith.addf %22, %23 : vector<16x32xf32>
    %25 = arith.truncf %24 : vector<16x32xf32> to vector<16x32xbf16>
    %c0_11 = arith.constant 0 : index
    %c0_12 = arith.constant 0 : index
    %26 = vector.load %arg5[%c0_11, %c0_12] : memref<32x32xbf16, #tpu.memory_space<vmem>>, vector<32x32xbf16>
    %cst_13 = arith.constant dense<0.000000e+00> : vector<16x32xf32>
    %27 = tpu.matmul %25, %26, %cst_13 {dimension_numbers = #tpu.dot_dimension_numbers<[1], [0], [0], [1], [0, 0, 1, 1], [], []>} : vector<16x32xbf16>, vector<32x32xbf16>, vector<16x32xf32> -> vector<16x32xf32>
    %28 = vector.broadcast %3 : vector<1x32xf32> to vector<16x32xf32>
    %29 = arith.addf %27, %28 : vector<16x32xf32>
    %30 = arith.addf %0, %29 : vector<16x32xf32>
    %c0_14 = arith.constant 0 : index
    %c0_15 = arith.constant 0 : index
    %31 = vector.load %arg7[%c0_14, %c0_15] : memref<16x32xf32, #tpu.memory_space<vmem>>, vector<16x32xf32>
    tpu.vector_store %arg7[%c0_14, %c0_15], %30 {strides = array<i32>} : memref<16x32xf32, #tpu.memory_space<vmem>>, vector<16x32xf32>,
    return
  }
  func.func @transform_0(%arg0: i32, %arg1: memref<1xi32, #tpu.memory_space<smem>>) -> (i32, i32) {
    %c0_i32 = arith.constant 0 : i32
    %c0_i32_0 = arith.constant 0 : i32
    return %arg0, %c0_i32 : i32, i32
  }
  func.func @transform_1(%arg0: i32, %arg1: memref<1xi32, #tpu.memory_space<smem>>) -> (i32, i32) {
    %c0_i32 = arith.constant 0 : i32
    %c0_i32_0 = arith.constant 0 : i32
    %c0_i32_1 = arith.constant 0 : i32
    return %c0_i32, %c0_i32_0 : i32, i32
  }
  func.func @transform_2(%arg0: i32, %arg1: memref<1xi32, #tpu.memory_space<smem>>) -> (i32, i32) {
    %c0_i32 = arith.constant 0 : i32
    %c0_i32_0 = arith.constant 0 : i32
    %c0_i32_1 = arith.constant 0 : i32
    return %c0_i32, %c0_i32_0 : i32, i32
  }
  func.func @transform_3(%arg0: i32, %arg1: memref<1xi32, #tpu.memory_space<smem>>) -> (i32, i32) {
    %c0_i32 = arith.constant 0 : i32
    %c0_i32_0 = arith.constant 0 : i32
    %c0_i32_1 = arith.constant 0 : i32
    return %c0_i32, %c0_i32_0 : i32, i32
  }
  func.func @transform_4(%arg0: i32, %arg1: memref<1xi32, #tpu.memory_space<smem>>) -> (i32, i32) {
    %c0_i32 = arith.constant 0 : i32
    %c0_i32_0 = arith.constant 0 : i32
    %c0_i32_1 = arith.constant 0 : i32
    return %c0_i32, %c0_i32_0 : i32, i32
  }
  func.func @transform_5(%arg0: i32, %arg1: memref<1xi32, #tpu.memory_space<smem>>) -> (i32, i32) {
    %c0_i32 = arith.constant 0 : i32
    %c0_i32_0 = arith.constant 0 : i32
    return %arg0, %c0_i32 : i32, i32
  }
}

</mosaic_0001>

<llo_original>
// kernel: tpu_custom_call.1
$region0: #{tpu_custom_call.1}
  #allocation0 [shape = 'u32[]', space=smem, size = 0x4, offset = 0x4, fixed_abs, tag = 'smem constant byte address 0x4 - core index']
  #allocation1 [shape = 'u32[144,128]{1,0:T(1,128)}', space=vmem, size = 0x12000, scoped, tag = 'internal scratch']
  #allocation2 [shape = 's32[1]{0}', space=sflag, size = 0x4, scoped, tag = 'scoped memory for tpu_custom_call.1']
  #allocation3 [shape = 's32[1]{0:T(128)S(6)}', space=smem, size = 0x200, scoped, tag = 'prefetched SMEM operand 0']
  %s0 = inlined_call_operand.<no memory space> [shape: s32[1], index: 0, kind: input, shape index: {}]
  %s1 = inlined_call_operand.hbm [shape: f32[16,32], index: 1, kind: input, shape index: {}]
  %s2 = inlined_call_operand.hbm [shape: f32[1,32], index: 2, kind: input, shape index: {}]
  %s3 = inlined_call_operand.hbm [shape: f32[1,32], index: 3, kind: input, shape index: {}]
  %s4 = inlined_call_operand.hbm [shape: bf16[32,32], index: 4, kind: input, shape index: {}]
  %s5 = inlined_call_operand.hbm [shape: f32[1,32], index: 5, kind: input, shape index: {}]
  %s6 = inlined_call_operand.hbm [shape: f32[16,32], index: 6, kind: output, shape index: {}]
  %s7 = sld [smem:[#allocation0]]
  $region50: #{tpu_custom_call.1} parent=0
    _
  %s9 = ssub.s32 1, %s7
  %s10 = scalar_select 0, %s9, %s7
  %11 = sst [smem:[#allocation3]] %s0
  $region1: #{tpu_custom_call.1} parent=0
    #allocation4 [shape = 'u8[8192]{0}', space=vmem, size = 0x2000, scoped, tag = 'input window, operand 1, single buffered']
    #allocation5 [shape = 's32[1]{0}', space=sflag, size = 0x4, scoped, tag = 'scoped memory for tpu_custom_call.1']
    #allocation6 [shape = 's32[1]{0}', space=sflag, size = 0x4, scoped, tag = 'scoped memory for tpu_custom_call.1']
    #allocation7 [shape = 'u8[512]{0}', space=vmem, size = 0x400, scoped, tag = 'input window, operand 2, single buffered']
    #allocation8 [shape = 's32[1]{0}', space=sflag, size = 0x4, scoped, tag = 'scoped memory for tpu_custom_call.1']
    #allocation9 [shape = 'u8[512]{0}', space=vmem, size = 0x400, scoped, tag = 'input window, operand 3, single buffered']
    #allocation10 [shape = 'u8[8192]{0}', space=vmem, size = 0x2000, scoped, tag = 'input window, operand 4, single buffered']
    #allocation11 [shape = 's32[1]{0}', space=sflag, size = 0x4, scoped, tag = 'scoped memory for tpu_custom_call.1']
    #allocation12 [shape = 'u8[512]{0}', space=vmem, size = 0x400, scoped, tag = 'input window, operand 5, single buffered']
    #allocation13 [shape = 'u8[8192]{0}', space=vmem, size = 0x2000, scoped, tag = 'output window, operand 0, single buffered']
    %12 = vsyncpa [#allocation5], 0
    %13 = vsyncpa [#allocation8], 0
    %14 = vsyncpa [#allocation11], 0
    %15 = vsyncpa [#allocation6], 0
    // Predicated region
    $region2: #{tpu_custom_call.1} parent=1 // pred_check
      _
    $region3: #{tpu_custom_call.1} parent=1 // pred_check_branch
      %17 = sbr.rel (0) target = $region5
    $region4: #{tpu_custom_call.1} parent=1 // pred_region
      %s19 = ssub.s32 256, 256
      %20 = vsyncadd [#allocation5], %s19
      %s21 = sshll.u32 [#allocation4], 4
      %s22 = int_to_ptr.vmem [resolvable:$true] %s21
      %27 = dma.hbm_to_vmem [thread:$0]  %s1, 256, %s22, [#allocation5], 128, 128, 8
    $region5: #{tpu_custom_call.1} parent=1 // pred_fallthru
      _
    // Predicated region
    $region6: #{tpu_custom_call.1} parent=1 // pred_check
      _
    $region7: #{tpu_custom_call.1} parent=1 // pred_check_branch
      %29 = sbr.rel (0) target = $region9
    $region8: #{tpu_custom_call.1} parent=1 // pred_region
      %s31 = ssub.s32 16, 16
      %32 = vsyncadd [#allocation8], %s31
      %s34 = sshll.u32 [#allocation7], 4
      %s35 = int_to_ptr.vmem [resolvable:$true] %s34
      %37 = dma.hbm_to_vmem [thread:$0]  %s2, 16, %s35, [#allocation8]
    $region9: #{tpu_custom_call.1} parent=1 // pred_fallthru
      _
    // Predicated region
    $region10: #{tpu_custom_call.1} parent=1 // pred_check
      _
    $region11: #{tpu_custom_call.1} parent=1 // pred_check_branch
      %39 = sbr.rel (0) target = $region13
    $region12: #{tpu_custom_call.1} parent=1 // pred_region
      %s41 = ssub.s32 16, 16
      %42 = vsyncadd [#allocation8], %s41
      %s44 = sshll.u32 [#allocation9], 4
      %s45 = int_to_ptr.vmem [resolvable:$true] %s44
      %47 = dma.hbm_to_vmem [thread:$0]  %s3, 16, %s45, [#allocation8]
    $region13: #{tpu_custom_call.1} parent=1 // pred_fallthru
      _
    // Predicated region
    $region14: #{tpu_custom_call.1} parent=1 // pred_check
      _
    $region15: #{tpu_custom_call.1} parent=1 // pred_check_branch
      %49 = sbr.rel (0) target = $region17
    $region16: #{tpu_custom_call.1} parent=1 // pred_region
      %s51 = ssub.s32 256, 256
      %52 = vsyncadd [#allocation11], %s51
      %s53 = sshll.u32 [#allocation10], 4
      %s54 = int_to_ptr.vmem [resolvable:$true] %s53
      %59 = dma.hbm_to_vmem [thread:$0]  %s4, 256, %s54, [#allocation11], 64, 64, 4
    $region17: #{tpu_custom_call.1} parent=1 // pred_fallthru
      _
    // Predicated region
    $region18: #{tpu_custom_call.1} parent=1 // pred_check
      _
    $region19: #{tpu_custom_call.1} parent=1 // pred_check_branch
      %61 = sbr.rel (0) target = $region21
    $region20: #{tpu_custom_call.1} parent=1 // pred_region
      %s63 = ssub.s32 16, 16
      %64 = vsyncadd [#allocation11], %s63
      %s66 = sshll.u32 [#allocation12], 4
      %s67 = int_to_ptr.vmem [resolvable:$true] %s66
      %69 = dma.hbm_to_vmem [thread:$0]  %s5, 16, %s67, [#allocation11]
    $region21: #{tpu_custom_call.1} parent=1 // pred_fallthru
      _
    // Predicated region
    $region22: #{tpu_custom_call.1} parent=1 // pred_check
      _
    $region23: #{tpu_custom_call.1} parent=1 // pred_check_branch
      %71 = sbr.rel (0) target = $region25
    $region24: #{tpu_custom_call.1} parent=1 // pred_region
      %72 = dma.done [#allocation5], 256
    $region25: #{tpu_custom_call.1} parent=1 // pred_fallthru
      _
    // Predicated region
    $region26: #{tpu_custom_call.1} parent=1 // pred_check
      _
    $region27: #{tpu_custom_call.1} parent=1 // pred_check_branch
      %74 = sbr.rel (0) target = $region29
    $region28: #{tpu_custom_call.1} parent=1 // pred_region
      %75 = dma.done [#allocation8], 16
    $region29: #{tpu_custom_call.1} parent=1 // pred_fallthru
      _
    // Predicated region
    $region30: #{tpu_custom_call.1} parent=1 // pred_check
      _
    $region31: #{tpu_custom_call.1} parent=1 // pred_check_branch
      %77 = sbr.rel (0) target = $region33
    $region32: #{tpu_custom_call.1} parent=1 // pred_region
      %78 = dma.done [#allocation8], 16
    $region33: #{tpu_custom_call.1} parent=1 // pred_fallthru
      _
    // Predicated region
    $region34: #{tpu_custom_call.1} parent=1 // pred_check
      _
    $region35: #{tpu_custom_call.1} parent=1 // pred_check_branch
      %80 = sbr.rel (0) target = $region37
    $region36: #{tpu_custom_call.1} parent=1 // pred_region
      %81 = dma.done [#allocation11], 256
    $region37: #{tpu_custom_call.1} parent=1 // pred_fallthru
      _
    // Predicated region
    $region38: #{tpu_custom_call.1} parent=1 // pred_check
      _
    $region39: #{tpu_custom_call.1} parent=1 // pred_check_branch
      %83 = sbr.rel (0) target = $region41
    $region40: #{tpu_custom_call.1} parent=1 // pred_region
      %84 = dma.done [#allocation11], 16
    $region41: #{tpu_custom_call.1} parent=1 // pred_fallthru
      _
    %v86 = vld [vmem:[#allocation4] sm:$0xff]
    %v87 = vld [vmem:[#allocation4 + $0x8] sm:$0xff]
    %v88 = vld [vmem:[#allocation7] sm:$0x1]
    %v89 = vld [vmem:[#allocation9] sm:$0x1]
    %v90 = vld [vmem:[#allocation12] sm:$0x1]
    %vm91 = vcmask 261120
    %v92 = vsel %vm91, %v86, 0.0
    %93 = vadd.xlane.f32.xlu0 %v92
    %v94 = vpop.xlane.xlu0 %93
    %v95 = vsel %vm91, %v87, 0.0
    %96 = vadd.xlane.f32.xlu0 %v95
    %v97 = vpop.xlane.xlu0 %96
    %v98 = vrcp.pop 32.0
    %v99 = vmul.f32 %v94, %v98
    %v100 = vmul.f32 %v97, %v98
    %v101 = vsub.f32 %v86, %v99
    %v102 = vsub.f32 %v87, %v100
    %v103 = vmul.f32 %v101, %v101
    %v104 = vmul.f32 %v102, %v102
    %v105 = vsel %vm91, %v103, 0.0
    %106 = vadd.xlane.f32.xlu0 %v105
    %v107 = vpop.xlane.xlu0 %106
    %v108 = vsel %vm91, %v104, 0.0
    %109 = vadd.xlane.f32.xlu0 %v108
    %v110 = vpop.xlane.xlu0 %109
    %v111 = vmul.f32 %v107, 0.032258064
    %v112 = vmul.f32 %v110, 0.032258064
    %v113 = vrsqrt.pop %v111
    %v114 = vmul.f32 %v111, %v113
    %vm115 = vcmp.eq.f32.partialorder %v111, inf
    %v116 = vsel %vm115, %v111, %v114
    %vm117 = vcmp.eq.f32.partialorder %v111, 0.0
    %v118 = vand.u32 %v111, 2147483648
    %v119 = vsel %vm117, %v118, %v116
    %v120 = vrsqrt.pop %v112
    %v121 = vmul.f32 %v112, %v120
    %vm122 = vcmp.eq.f32.partialorder %v112, inf
    %v123 = vsel %vm122, %v112, %v121
    %vm124 = vcmp.eq.f32.partialorder %v112, 0.0
    %v125 = vand.u32 %v112, 2147483648
    %v126 = vsel %vm124, %v125, %v123
    %v127 = vadd.f32 %v119, 1e-06
    %v128 = vadd.f32 %v126, 1e-06
    %v129 = vrcp.pop %v127
    %v130 = vrcp.pop %v128
    %v131 = vmul.f32 %v101, %v129
    %v132 = vmul.f32 %v102, %v130
    %v134 = vlaneseq
    %v135 = vshrl.u32 %v134, 7
    %v136 = vsub.s32 0, %v135
    %v137 = vrot.slane %v88, %v136
    %v139 = vmul.f32 %v131, %v137
    %v140 = vmul.f32 %v132, %v137
    %v142 = vlaneseq
    %v143 = vshrl.u32 %v142, 7
    %v144 = vsub.s32 0, %v143
    %v145 = vrot.slane %v89, %v144
    %v147 = vadd.f32 %v139, %v145
    %v148 = vadd.f32 %v140, %v145
    %v149 = vpack.c.bf16 %v148, %v147
    %v150 = vld [vmem:[#allocation10] sm:$0xf]
    %v151 = vld [vmem:[#allocation10 + $0x4] sm:$0xf]
    %v152 = vld [vmem:[#allocation10 + $0x8] sm:$0xf]
    %v153 = vld [vmem:[#allocation10 + $0xc] sm:$0xf]
    %v155 = vlaneseq
    %v156 = vshrl.u32 %v155, 7
    %v157 = vsub.s32 0, %v156
    %v158 = vrot.slane %v90, %v157
    %v164 = vunpack.c.l.b16 %v150
    %v165 = vunpack.c.l.b16 %v151
    %v166 = vunpack.c.l.b16 %v152
    %v167 = vunpack.c.l.b16 %v153
    %v168 = vpack.c.b16 %v165, %v164
    %v169 = vpack.c.b16 %v167, %v166
    %v173 = vsel %vm91, %v149, 0
    %175 = vmatprep.subr.bf16.mxu0 0
    %176 = vmatpush1.bf16.msra.mxu0 %v168
    %177 = vmatprep.subr.bf16.mxu0 0
    %178 = vmatpush1.bf16.msra.mxu0 %v169
    %179 = vmatprep.subr.bf16.mxu0 0
    %180 = vmatpush1.bf16.msra.mxu0 0
    %181 = vmatprep.subr.bf16.mxu0 0
    %182 = vmatpush1.bf16.msra.mxu0 0
    %183 = vmatprep.subr.bf16.mxu0 0
    %184 = vmatpush1.bf16.msra.mxu0 0
    %185 = vmatprep.subr.bf16.mxu0 0
    %186 = vmatpush1.bf16.msra.mxu0 0
    %187 = vmatprep.subr.bf16.mxu0 0
    %188 = vmatpush1.bf16.msra.mxu0 0
    %189 = vmatprep.subr.bf16.mxu0 0
    %190 = vmatpush1.bf16.msra.mxu0 0
    %191 = vmatprep.subr.bf16.mxu0 0
    %192 = vmatpush1.bf16.msra.mxu0 0
    %193 = vmatprep.subr.bf16.mxu0 0
    %194 = vmatpush1.bf16.msra.mxu0 0
    %195 = vmatprep.subr.bf16.mxu0 0
    %196 = vmatpush1.bf16.msra.mxu0 0
    %197 = vmatprep.subr.bf16.mxu0 0
    %198 = vmatpush1.bf16.msra.mxu0 0
    %199 = vmatprep.subr.bf16.mxu0 0
    %200 = vmatpush1.bf16.msra.mxu0 0
    %201 = vmatprep.subr.bf16.mxu0 0
    %202 = vmatpush1.bf16.msra.mxu0 0
    %203 = vmatprep.subr.bf16.mxu0 0
    %204 = vmatpush1.bf16.msra.mxu0 0
    %205 = vmatprep.subr.bf16.mxu0 0
    %206 = vmatpush1.bf16.msra.mxu0 0
    %207 = vmatprep.mubr.bf16.mxu0 0
    %208 = vmatmul.mubr.bf16.gmra.mrb[0].mxu0 %v173
    %v209 = vpop.f32.mrb[0].mxu0
    %v210 = vadd.f32 %v158, %v209
    %v211 = vpop.f32.mrb[0].mxu0
    %v212 = vpop.f32.mrb[0].mxu0
    %v213 = vadd.f32 %v158, %v212
    %v214 = vpop.f32.mrb[0].mxu0
    %215 = vdwg.mxu0
    %v216 = vadd.f32 %v86, %v210
    %v217 = vadd.f32 %v87, %v213
    %218 = vst.msk [vmem:[#allocation13] sm:$0xff] %vm91, %v216
    %219 = vst.msk [vmem:[#allocation13 + $0x8] sm:$0xff] %vm91, %v217
    // Predicated region
    $region42: #{tpu_custom_call.1} parent=1 // pred_check
      _
    $region43: #{tpu_custom_call.1} parent=1 // pred_check_branch
      %221 = sbr.rel (0) target = $region45
    $region44: #{tpu_custom_call.1} parent=1 // pred_region
      %s223 = ssub.s32 256, 256
      %224 = vsyncadd [#allocation6], %s223
      %s225 = sshll.u32 [#allocation13], 4
      %s226 = int_to_ptr.vmem [resolvable:$true] %s225
      %231 = dma.vmem_to_hbm [thread:$0]  %s226, 256, %s6, [#allocation6], 128, 128, 8
    $region45: #{tpu_custom_call.1} parent=1 // pred_fallthru
      _
    // Predicated region
    $region46: #{tpu_custom_call.1} parent=1 // pred_check
      _
    $region47: #{tpu_custom_call.1} parent=1 // pred_check_branch
      %233 = sbr.rel (0) target = $region49
    $region48: #{tpu_custom_call.1} parent=1 // pred_region
      %234 = dma.done [#allocation6], 256
    $region49: #{tpu_custom_call.1} parent=1 // pred_fallthru
      _
    %235 = vsyncpa [#allocation5], 1
    %236 = vsyncpa [#allocation8], 1
    %237 = vsyncpa [#allocation11], 1
    %238 = vsyncpa [#allocation6], 1

</llo_original>
